<compile_context>
chip_gen: v7x
topology: tpu7x:2x2x1
jax: 0.10.0
libtpu: 0.0.40
codegen_flags: <defaults>
</compile_context>

<pallas_src>
import jax
import jax.numpy as jnp
from jax.experimental import pallas as pl
from jax.experimental.pallas import tpu as pltpu


def _cdiv(a, b):
    return (a + b - 1) // b


def _round_up(n, m):
    return ((n + m - 1) // m) * m


def _choose_batch_tile(B, block_b, sublane):
    """Rows per block: multiple of `sublane`, capped at block_b, preferring an
    even grid with >= 2 steps so v7x's two TensorCores both participate."""
    if B <= sublane:
        return sublane                              # single (ragged) block
    TB = min(block_b, _round_up(B, sublane))
    steps = _cdiv(B, TB)
    if steps == 1 or steps % 2 == 1:
        target = 2 if steps == 1 else steps + 1     # next even step count
        tb_even = _round_up(_cdiv(B, target), sublane)
        if tb_even >= sublane and _cdiv(B, tb_even) >= 2:
            TB = tb_even
    return TB


def _dalayer_kernel(xflat_ref, w1_ref, b1_ref, w2e_ref, b2e_ref, o_ref):
    # xflat_ref: (TB, C*D)   w1_ref: (C*D, C)   b1_ref:  (1, C)
    # w2e_ref:   (C, C*D)    b2e_ref: (1, C*D)  o_ref:   (TB, C*D)
    h = jnp.dot(xflat_ref[...], w1_ref[...], preferred_element_type=jnp.float32)
    h = jnp.maximum(h + b1_ref[...], 0.0)                       # ReLU (VPU)
    # layer2 fused with the attention (C,)->(C,D) broadcast: w2's columns are
    # replicated D times; tanh applied afterwards is bitwise-identical.
    a = jnp.tanh(jnp.dot(h, w2e_ref[...], preferred_element_type=jnp.float32)
                 + b2e_ref[...])                                # (TB, C*D), tanh -> EUP
    # Re-load x for the final scale (cheap second vld; avoids keeping a
    # TB x 128 value live across two matmuls -> no vreg spill traffic).
    o_ref[...] = (xflat_ref[...].astype(jnp.float32) * (1.0 + a)).astype(o_ref.dtype)


def dalayer_forward(x, w1, b1, w2, b2, *, block_b=4096):
    """x: (B, num_caps, in_dim); w1: (C*D, C); b1: (C,); w2: (C, C); b2: (C,)."""
    B, C, D = x.shape
    CD = C * D
    x_flat = x.reshape(B, CD)                      # free glue reshape, outside kernel

    itemsize = jnp.dtype(x.dtype).itemsize
    sublane = 8 * max(1, 4 // itemsize)            # 8 for f32, 16 for bf16
    TB = _choose_batch_tile(B, block_b, sublane)
    grid = (pl.cdiv(B, TB),)                       # ragged last block handled by Pallas

    # layer2 weights pre-fused with the (C,) -> (C, D) attention broadcast.
    w2e = jnp.repeat(w2, D, axis=1)                # (C, C*D)
    b2e = jnp.repeat(b2, D).reshape(1, CD)         # (1, C*D)

    cost = pl.CostEstimate(
        flops=2 * B * (CD * C + C * CD) + 2 * B * CD,
        transcendentals=B * CD,
        bytes_accessed=2 * B * CD * itemsize,
    )

    out_flat = pl.pallas_call(
        _dalayer_kernel,
        out_shape=jax.ShapeDtypeStruct((B, CD), x.dtype),
        grid_spec=pltpu.PrefetchScalarGridSpec(
            num_scalar_prefetch=0,
            grid=grid,
            in_specs=[
                pl.BlockSpec((TB, CD), lambda i: (i, 0)),   # x_flat: streamed per block
                pl.BlockSpec((CD, C), lambda i: (0, 0)),    # w1:  VMEM-resident
                pl.BlockSpec((1, C), lambda i: (0, 0)),     # b1:  VMEM-resident
                pl.BlockSpec((C, CD), lambda i: (0, 0)),    # w2e: VMEM-resident
                pl.BlockSpec((1, CD), lambda i: (0, 0)),    # b2e: VMEM-resident
            ],
            out_specs=pl.BlockSpec((TB, CD), lambda i: (i, 0)),
        ),
        compiler_params=pltpu.CompilerParams(
            dimension_semantics=("parallel",),              # 2-TC sharding on v7x
            vmem_limit_bytes=32 * 1024 * 1024,              # fine for TB <= 4096 on all gens
        ),
        cost_estimate=cost,
        input_output_aliases={0: 0},                        # donate flat x to flat out
    )(x_flat, w1, b1.reshape(1, C), w2e, b2e)

    return out_flat.reshape(B, C, D)


def init_dalayer_params(key, num_caps, in_dim, dtype=jnp.float32):
    """Deterministic init mimicking torch.nn.Linear default (uniform +-1/sqrt(fan_in))."""
    k1, k2, k3, k4 = jax.random.split(key, 4)
    fan1 = in_dim * num_caps
    bound1 = 1.0 / (fan1 ** 0.5)
    # Stored transposed: (in_features, out_features) so the kernel does flat @ W.
    w1 = jax.random.uniform(k1, (fan1, num_caps), dtype, -bound1, bound1)
    b1 = jax.random.uniform(k2, (num_caps,), dtype, -bound1, bound1)
    fan2 = num_caps
    bound2 = 1.0 / (fan2 ** 0.5)
    w2 = jax.random.uniform(k3, (fan2, num_caps), dtype, -bound2, bound2)
    b2 = jax.random.uniform(k4, (num_caps,), dtype, -bound2, bound2)
    return w1, b1, w2, b2


def dalayer_reference(x, w1, b1, w2, b2):
    B = x.shape[0]
    flat = x.reshape(B, -1)
    h = jnp.maximum(flat @ w1 + b1, 0.0)
    a = jnp.tanh(h @ w2 + b2)
    return x * (1.0 + a[:, :, None])


if __name__ == "__main__":
    num_caps, in_dim = 8, 16   # C*D = 128 -> lane-dense flat layout

    key = jax.random.PRNGKey(0)
    kx, kp, kx2 = jax.random.split(key, 3)
    w1, b1, w2, b2 = init_dalayer_params(kp, num_caps, in_dim)

    # Case 1: tiny batch (single ragged block).
    B1 = 2
    x1 = jax.random.normal(kx, (B1, num_caps, in_dim), jnp.float32)
    ref1 = dalayer_reference(x1, w1, b1, w2, b2)        # computed before kernel
    out1 = jax.block_until_ready(dalayer_forward(x1, w1, b1, w2, b2))
    assert out1.shape == (B1, num_caps, in_dim)
    assert jnp.allclose(out1, ref1, atol=1e-5, rtol=1e-5), "mismatch vs reference (B=2)"

    # Case 2: multi-block grid with a ragged last block (exercises the
    # even-step / no-explicit-pad path).
    B2 = 10
    x2 = jax.random.normal(kx2, (B2, num_caps, in_dim), jnp.float32)
    ref2 = dalayer_reference(x2, w1, b1, w2, b2)
    out2 = jax.block_until_ready(dalayer_forward(x2, w1, b1, w2, b2))
    assert out2.shape == (B2, num_caps, in_dim)
    assert jnp.allclose(out2, ref2, atol=1e-5, rtol=1e-5), "mismatch vs reference (B=10)"

    print("KERNEL_OK")
</pallas_src>

<mosaic_0001>
module attributes {stable_mosaic.version = 11 : i64} {
  func.func @_dalayer_kernel(%arg0: i32, %arg1: memref<8x128xf32, #tpu.memory_space<vmem>>, %arg2: memref<128x8xf32, #tpu.memory_space<vmem>>, %arg3: memref<1x8xf32, #tpu.memory_space<vmem>>, %arg4: memref<8x128xf32, #tpu.memory_space<vmem>>, %arg5: memref<1x128xf32, #tpu.memory_space<vmem>>, %arg6: memref<8x128xf32, #tpu.memory_space<vmem>>) attributes {dimension_semantics = [#tpu.dimension_semantics<parallel>], iteration_bounds = array<i64: 1>, scalar_prefetch = 0 : i64, scratch_operands = 0 : i64, tpu.core_type = #tpu.core_type<tc>, window_params = [{transform_indices = @transform_0, window_bounds = array<i64: 8, 128>}, {pipeline_mode = #tpu.pipeline_mode<synchronous>, transform_indices = @transform_1, window_bounds = array<i64: 128, 8>}, {pipeline_mode = #tpu.pipeline_mode<synchronous>, transform_indices = @transform_2, window_bounds = array<i64: 1, 8>}, {pipeline_mode = #tpu.pipeline_mode<synchronous>, transform_indices = @transform_3, window_bounds = array<i64: 8, 128>}, {pipeline_mode = #tpu.pipeline_mode<synchronous>, transform_indices = @transform_4, window_bounds = array<i64: 1, 128>}, {transform_indices = @transform_5, window_bounds = array<i64: 8, 128>}]} {
    %c0 = arith.constant 0 : index
    %c0_0 = arith.constant 0 : index
    %0 = vector.load %arg1[%c0, %c0_0] : memref<8x128xf32, #tpu.memory_space<vmem>>, vector<8x128xf32>
    %c0_1 = arith.constant 0 : index
    %c0_2 = arith.constant 0 : index
    %1 = vector.load %arg2[%c0_1, %c0_2] : memref<128x8xf32, #tpu.memory_space<vmem>>, vector<128x8xf32>
    %cst = arith.constant dense<0.000000e+00> : vector<8x8xf32>
    %2 = tpu.matmul %0, %1, %cst {dimension_numbers = #tpu.dot_dimension_numbers<[1], [0], [0], [1], [0, 0, 1, 1], [], []>} : vector<8x128xf32>, vector<128x8xf32>, vector<8x8xf32> -> vector<8x8xf32>
    %c0_3 = arith.constant 0 : index
    %c0_4 = arith.constant 0 : index
    %3 = vector.load %arg3[%c0_3, %c0_4] : memref<1x8xf32, #tpu.memory_space<vmem>>, vector<1x8xf32>
    %4 = vector.broadcast %3 : vector<1x8xf32> to vector<8x8xf32>
    %5 = arith.addf %2, %4 : vector<8x8xf32>
    %cst_5 = arith.constant 0.000000e+00 : f32
    %6 = vector.broadcast %cst_5 : f32 to vector<8x8xf32>
    %7 = arith.maximumf %5, %6 : vector<8x8xf32>
    %c0_6 = arith.constant 0 : index
    %c0_7 = arith.constant 0 : index
    %8 = vector.load %arg4[%c0_6, %c0_7] : memref<8x128xf32, #tpu.memory_space<vmem>>, vector<8x128xf32>
    %cst_8 = arith.constant dense<0.000000e+00> : vector<8x128xf32>
    %9 = tpu.matmul %7, %8, %cst_8 {dimension_numbers = #tpu.dot_dimension_numbers<[1], [0], [0], [1], [0, 0, 1, 1], [], []>} : vector<8x8xf32>, vector<8x128xf32>, vector<8x128xf32> -> vector<8x128xf32>
    %c0_9 = arith.constant 0 : index
    %c0_10 = arith.constant 0 : index
    %10 = vector.load %arg5[%c0_9, %c0_10] : memref<1x128xf32, #tpu.memory_space<vmem>>, vector<1x128xf32>
    %11 = vector.broadcast %10 : vector<1x128xf32> to vector<8x128xf32>
    %12 = arith.addf %9, %11 : vector<8x128xf32>
    %13 = math.tanh %12 : vector<8x128xf32>
    %c0_11 = arith.constant 0 : index
    %c0_12 = arith.constant 0 : index
    %14 = vector.load %arg1[%c0_11, %c0_12] : memref<8x128xf32, #tpu.memory_space<vmem>>, vector<8x128xf32>
    %cst_13 = arith.constant 1.000000e+00 : f32
    %15 = vector.broadcast %cst_13 : f32 to vector<8x128xf32>
    %16 = arith.addf %15, %13 : vector<8x128xf32>
    %17 = arith.mulf %14, %16 : vector<8x128xf32>
    %c0_14 = arith.constant 0 : index
    %c0_15 = arith.constant 0 : index
    %18 = vector.load %arg6[%c0_14, %c0_15] : memref<8x128xf32, #tpu.memory_space<vmem>>, vector<8x128xf32>
    tpu.vector_store %arg6[%c0_14, %c0_15], %17 {strides = array<i32>} : memref<8x128xf32, #tpu.memory_space<vmem>>, vector<8x128xf32>,
    return
  }
  func.func @transform_0(%arg0: i32) -> (i32, i32) {
    %c0_i32 = arith.constant 0 : i32
    %c0_i32_0 = arith.constant 0 : i32
    return %arg0, %c0_i32 : i32, i32
  }
  func.func @transform_1(%arg0: i32) -> (i32, i32) {
    %c0_i32 = arith.constant 0 : i32
    %c0_i32_0 = arith.constant 0 : i32
    %c0_i32_1 = arith.constant 0 : i32
    return %c0_i32, %c0_i32_0 : i32, i32
  }
  func.func @transform_2(%arg0: i32) -> (i32, i32) {
    %c0_i32 = arith.constant 0 : i32
    %c0_i32_0 = arith.constant 0 : i32
    %c0_i32_1 = arith.constant 0 : i32
    return %c0_i32, %c0_i32_0 : i32, i32
  }
  func.func @transform_3(%arg0: i32) -> (i32, i32) {
    %c0_i32 = arith.constant 0 : i32
    %c0_i32_0 = arith.constant 0 : i32
    %c0_i32_1 = arith.constant 0 : i32
    return %c0_i32, %c0_i32_0 : i32, i32
  }
  func.func @transform_4(%arg0: i32) -> (i32, i32) {
    %c0_i32 = arith.constant 0 : i32
    %c0_i32_0 = arith.constant 0 : i32
    %c0_i32_1 = arith.constant 0 : i32
    return %c0_i32, %c0_i32_0 : i32, i32
  }
  func.func @transform_5(%arg0: i32) -> (i32, i32) {
    %c0_i32 = arith.constant 0 : i32
    %c0_i32_0 = arith.constant 0 : i32
    return %arg0, %c0_i32 : i32, i32
  }
}

</mosaic_0001>

<llo_original>
// kernel: tpu_custom_call.1
$region0: #{tpu_custom_call.1}
  #allocation0 [shape = 'u32[]', space=smem, size = 0x4, offset = 0x4, fixed_abs, tag = 'smem constant byte address 0x4 - core index']
  #allocation1 [shape = 'u32[144,128]{1,0:T(1,128)}', space=vmem, size = 0x12000, scoped, tag = 'internal scratch']
  %s0 = inlined_call_operand.hbm [shape: f32[2,128], index: 0, kind: input, shape index: {}, may-alias: {0,5}]
  %s1 = inlined_call_operand.vmem [shape: f32[128,8], index: 1, kind: input, shape index: {}]
  %s2 = inlined_call_operand.vmem [shape: f32[1,8], index: 2, kind: input, shape index: {}]
  %s3 = inlined_call_operand.vmem [shape: f32[8,128], index: 3, kind: input, shape index: {}]
  %s4 = inlined_call_operand.vmem [shape: f32[1,128], index: 4, kind: input, shape index: {}]
  %s5 = inlined_call_operand.hbm [shape: f32[2,128], index: 5, kind: output, shape index: {}, may-alias: {0,5}]
  %s6 = sld [smem:[#allocation0]]
  $region34: #{tpu_custom_call.1} parent=0
    _
  %s8 = ssub.s32 1, %s6
  %s9 = scalar_select 0, %s8, %s6
  $region1: #{tpu_custom_call.1} parent=0
    #allocation2 [shape = 'u8[4096]{0}', space=vmem, size = 0x1000, scoped, tag = 'input window, operand 0, single buffered']
    #allocation3 [shape = 's32[1]{0}', space=sflag, size = 0x4, scoped, tag = 'scoped memory for tpu_custom_call.1']
    #allocation4 [shape = 's32[1]{0}', space=sflag, size = 0x4, scoped, tag = 'scoped memory for tpu_custom_call.1']
    #allocation5 [shape = 'u8[4096]{0}', space=vmem, size = 0x1000, scoped, tag = 'output window, operand 0, single buffered']
    %10 = vsyncpa [#allocation3], 0
    %11 = vsyncpa [#allocation4], 0
    // Predicated region
    $region2: #{tpu_custom_call.1} parent=1 // pred_check
      _
    $region3: #{tpu_custom_call.1} parent=1 // pred_check_branch
      %13 = sbr.rel (0) target = $region5
    $region4: #{tpu_custom_call.1} parent=1 // pred_region
      %s15 = ssub.s32 128, 32
      %16 = vsyncadd [#allocation3], %s15
      %s17 = sshll.u32 [#allocation2], 4
      %s18 = int_to_ptr.vmem [resolvable:$true] %s17
      %23 = dma.hbm_to_vmem [thread:$0]  %s0, 32, %s18, [#allocation3], 32, 32, 2
    $region5: #{tpu_custom_call.1} parent=1 // pred_fallthru
      _
    // Predicated region
    $region6: #{tpu_custom_call.1} parent=1 // pred_check
      _
    $region7: #{tpu_custom_call.1} parent=1 // pred_check_branch
      %25 = sbr.rel (0) target = $region9
    $region8: #{tpu_custom_call.1} parent=1 // pred_region
      _
    $region9: #{tpu_custom_call.1} parent=1 // pred_fallthru
      _
    // Predicated region
    $region10: #{tpu_custom_call.1} parent=1 // pred_check
      _
    $region11: #{tpu_custom_call.1} parent=1 // pred_check_branch
      %27 = sbr.rel (0) target = $region13
    $region12: #{tpu_custom_call.1} parent=1 // pred_region
      _
    $region13: #{tpu_custom_call.1} parent=1 // pred_fallthru
      _
    // Predicated region
    $region14: #{tpu_custom_call.1} parent=1 // pred_check
      _
    $region15: #{tpu_custom_call.1} parent=1 // pred_check_branch
      %29 = sbr.rel (0) target = $region17
    $region16: #{tpu_custom_call.1} parent=1 // pred_region
      _
    $region17: #{tpu_custom_call.1} parent=1 // pred_fallthru
      _
    // Predicated region
    $region18: #{tpu_custom_call.1} parent=1 // pred_check
      _
    $region19: #{tpu_custom_call.1} parent=1 // pred_check_branch
      %31 = sbr.rel (0) target = $region21
    $region20: #{tpu_custom_call.1} parent=1 // pred_region
      _
    $region21: #{tpu_custom_call.1} parent=1 // pred_fallthru
      _
    // Predicated region
    $region22: #{tpu_custom_call.1} parent=1 // pred_check
      _
    $region23: #{tpu_custom_call.1} parent=1 // pred_check_branch
      %33 = sbr.rel (0) target = $region25
    $region24: #{tpu_custom_call.1} parent=1 // pred_region
      %34 = dma.done [#allocation3], 128
    $region25: #{tpu_custom_call.1} parent=1 // pred_fallthru
      _
    %v35 = vld [vmem:[#allocation2] sm:$0xff]
    %v36 = vld [vmem:[%s1] sm:$0xff]
    %v37 = vld [vmem:[%s1 + $0x8] sm:$0xff]
    %v38 = vld [vmem:[%s1 + $0x10] sm:$0xff]
    %v39 = vld [vmem:[%s1 + $0x18] sm:$0xff]
    %v40 = vld [vmem:[%s1 + $0x20] sm:$0xff]
    %v41 = vld [vmem:[%s1 + $0x28] sm:$0xff]
    %v42 = vld [vmem:[%s1 + $0x30] sm:$0xff]
    %v43 = vld [vmem:[%s1 + $0x38] sm:$0xff]
    %v44 = vld [vmem:[%s1 + $0x40] sm:$0xff]
    %v45 = vld [vmem:[%s1 + $0x48] sm:$0xff]
    %v46 = vld [vmem:[%s1 + $0x50] sm:$0xff]
    %v47 = vld [vmem:[%s1 + $0x58] sm:$0xff]
    %v48 = vld [vmem:[%s1 + $0x60] sm:$0xff]
    %v49 = vld [vmem:[%s1 + $0x68] sm:$0xff]
    %v50 = vld [vmem:[%s1 + $0x70] sm:$0xff]
    %v51 = vld [vmem:[%s1 + $0x78] sm:$0xff]
    %v52 = vld [vmem:[%s2] sm:$0x1]
    %v54 = vlaneseq
    %v55 = vshrl.u32 %v54, 7
    %v56 = vsub.s32 0, %v55
    %v57 = vrot.slane %v52, %v56
    %59 = vmatprep.subr.mxu0 0.0
    %60 = vmatpush1.msra.mxu0 %v36
    %61 = vmatprep.subr.mxu0 0.0
    %62 = vmatpush1.msra.mxu0 %v37
    %63 = vmatprep.subr.mxu0 0.0
    %64 = vmatpush1.msra.mxu0 %v38
    %65 = vmatprep.subr.mxu0 0.0
    %66 = vmatpush1.msra.mxu0 %v39
    %67 = vmatprep.subr.mxu0 0.0
    %68 = vmatpush1.msra.mxu0 %v40
    %69 = vmatprep.subr.mxu0 0.0
    %70 = vmatpush1.msra.mxu0 %v41
    %71 = vmatprep.subr.mxu0 0.0
    %72 = vmatpush1.msra.mxu0 %v42
    %73 = vmatprep.subr.mxu0 0.0
    %74 = vmatpush1.msra.mxu0 %v43
    %75 = vmatprep.subr.mxu0 0.0
    %76 = vmatpush1.msra.mxu0 %v44
    %77 = vmatprep.subr.mxu0 0.0
    %78 = vmatpush1.msra.mxu0 %v45
    %79 = vmatprep.subr.mxu0 0.0
    %80 = vmatpush1.msra.mxu0 %v46
    %81 = vmatprep.subr.mxu0 0.0
    %82 = vmatpush1.msra.mxu0 %v47
    %83 = vmatprep.subr.mxu0 0.0
    %84 = vmatpush1.msra.mxu0 %v48
    %85 = vmatprep.subr.mxu0 0.0
    %86 = vmatpush1.msra.mxu0 %v49
    %87 = vmatprep.subr.mxu0 0.0
    %88 = vmatpush1.msra.mxu0 %v50
    %89 = vmatprep.subr.mxu0 0.0
    %90 = vmatpush1.msra.mxu0 %v51
    %91 = vmatprep.subr.mxu0 0.0
    %92 = vmatpush1.msra.mxu0 0.0
    %93 = vmatprep.subr.mxu0 0.0
    %94 = vmatpush1.msra.mxu0 0.0
    %95 = vmatprep.subr.mxu0 0.0
    %96 = vmatpush1.msra.mxu0 0.0
    %97 = vmatprep.subr.mxu0 0.0
    %98 = vmatpush1.msra.mxu0 0.0
    %99 = vmatprep.subr.mxu0 0.0
    %100 = vmatpush1.msra.mxu0 0.0
    %101 = vmatprep.subr.mxu0 0.0
    %102 = vmatpush1.msra.mxu0 0.0
    %103 = vmatprep.subr.mxu0 0.0
    %104 = vmatpush1.msra.mxu0 0.0
    %105 = vmatprep.subr.mxu0 0.0
    %106 = vmatpush1.msra.mxu0 0.0
    %107 = vmatprep.subr.mxu0 0.0
    %108 = vmatpush1.msra.mxu0 0.0
    %109 = vmatprep.subr.mxu0 0.0
    %110 = vmatpush1.msra.mxu0 0.0
    %111 = vmatprep.subr.mxu0 0.0
    %112 = vmatpush1.msra.mxu0 0.0
    %113 = vmatprep.subr.mxu0 0.0
    %114 = vmatpush1.msra.mxu0 0.0
    %115 = vmatprep.subr.mxu0 0.0
    %116 = vmatpush1.msra.mxu0 0.0
    %117 = vmatprep.subr.mxu0 0.0
    %118 = vmatpush1.msra.mxu0 0.0
    %119 = vmatprep.subr.mxu0 0.0
    %120 = vmatpush1.msra.mxu0 0.0
    %121 = vmatprep.subr.mxu0 0.0
    %122 = vmatpush1.msra.mxu0 0.0
    %123 = vmatprep.mubr.f32.mxu0 0.0
    %124 = vmatmul.mubr.f32.gmra.mrb[0].mxu0 %v35
    %v125 = vpop.f32.mrb[0].mxu0
    %v126 = vadd.f32 %v57, %v125
    %v127 = vpop.f32.mrb[0].mxu0
    %128 = vdwg.mxu0
    %v129 = vmax.f32 %v126, 0.0
    %v130 = vld [vmem:[%s3] sm:$0xff]
    %v131 = vld [vmem:[%s4] sm:$0x1]
    %v133 = vlaneseq
    %v134 = vshrl.u32 %v133, 7
    %v135 = vsub.s32 0, %v134
    %v136 = vrot.slane %v131, %v135
    %vm138 = vcmask 64512
    %v140 = vsel %vm138, %v129, 0
    %142 = vmatprep.subr.mxu0 0.0
    %143 = vmatpush1.msra.mxu0 %v130
    %144 = vmatprep.subr.mxu0 0.0
    %145 = vmatpush1.msra.mxu0 0.0
    %146 = vmatprep.subr.mxu0 0.0
    %147 = vmatpush1.msra.mxu0 0.0
    %148 = vmatprep.subr.mxu0 0.0
    %149 = vmatpush1.msra.mxu0 0.0
    %150 = vmatprep.subr.mxu0 0.0
    %151 = vmatpush1.msra.mxu0 0.0
    %152 = vmatprep.subr.mxu0 0.0
    %153 = vmatpush1.msra.mxu0 0.0
    %154 = vmatprep.subr.mxu0 0.0
    %155 = vmatpush1.msra.mxu0 0.0
    %156 = vmatprep.subr.mxu0 0.0
    %157 = vmatpush1.msra.mxu0 0.0
    %158 = vmatprep.subr.mxu0 0.0
    %159 = vmatpush1.msra.mxu0 0.0
    %160 = vmatprep.subr.mxu0 0.0
    %161 = vmatpush1.msra.mxu0 0.0
    %162 = vmatprep.subr.mxu0 0.0
    %163 = vmatpush1.msra.mxu0 0.0
    %164 = vmatprep.subr.mxu0 0.0
    %165 = vmatpush1.msra.mxu0 0.0
    %166 = vmatprep.subr.mxu0 0.0
    %167 = vmatpush1.msra.mxu0 0.0
    %168 = vmatprep.subr.mxu0 0.0
    %169 = vmatpush1.msra.mxu0 0.0
    %170 = vmatprep.subr.mxu0 0.0
    %171 = vmatpush1.msra.mxu0 0.0
    %172 = vmatprep.subr.mxu0 0.0
    %173 = vmatpush1.msra.mxu0 0.0
    %174 = vmatprep.subr.mxu0 0.0
    %175 = vmatpush1.msra.mxu0 0.0
    %176 = vmatprep.subr.mxu0 0.0
    %177 = vmatpush1.msra.mxu0 0.0
    %178 = vmatprep.subr.mxu0 0.0
    %179 = vmatpush1.msra.mxu0 0.0
    %180 = vmatprep.subr.mxu0 0.0
    %181 = vmatpush1.msra.mxu0 0.0
    %182 = vmatprep.subr.mxu0 0.0
    %183 = vmatpush1.msra.mxu0 0.0
    %184 = vmatprep.subr.mxu0 0.0
    %185 = vmatpush1.msra.mxu0 0.0
    %186 = vmatprep.subr.mxu0 0.0
    %187 = vmatpush1.msra.mxu0 0.0
    %188 = vmatprep.subr.mxu0 0.0
    %189 = vmatpush1.msra.mxu0 0.0
    %190 = vmatprep.subr.mxu0 0.0
    %191 = vmatpush1.msra.mxu0 0.0
    %192 = vmatprep.subr.mxu0 0.0
    %193 = vmatpush1.msra.mxu0 0.0
    %194 = vmatprep.subr.mxu0 0.0
    %195 = vmatpush1.msra.mxu0 0.0
    %196 = vmatprep.subr.mxu0 0.0
    %197 = vmatpush1.msra.mxu0 0.0
    %198 = vmatprep.subr.mxu0 0.0
    %199 = vmatpush1.msra.mxu0 0.0
    %200 = vmatprep.subr.mxu0 0.0
    %201 = vmatpush1.msra.mxu0 0.0
    %202 = vmatprep.subr.mxu0 0.0
    %203 = vmatpush1.msra.mxu0 0.0
    %204 = vmatprep.subr.mxu0 0.0
    %205 = vmatpush1.msra.mxu0 0.0
    %206 = vmatprep.mubr.f32.mxu0 0.0
    %207 = vmatmul.mubr.f32.gmra.mrb[0].mxu0 %v140
    %v208 = vpop.f32.mrb[0].mxu0
    %v209 = vadd.f32 %v136, %v208
    %v210 = vpop.f32.mrb[0].mxu0
    %211 = vdwg.mxu0
    %v212 = vtanh.pop %v209
    %v213 = vadd.f32 %v212, 1.0
    %v214 = vmul.f32 %v35, %v213
    %215 = vst [vmem:[#allocation5] sm:$0xff] %v214
    // Predicated region
    $region26: #{tpu_custom_call.1} parent=1 // pred_check
      _
    $region27: #{tpu_custom_call.1} parent=1 // pred_check_branch
      %217 = sbr.rel (0) target = $region29
    $region28: #{tpu_custom_call.1} parent=1 // pred_region
      %s219 = ssub.s32 128, 32
      %220 = vsyncadd [#allocation4], %s219
      %s221 = sshll.u32 [#allocation5], 4
      %s222 = int_to_ptr.vmem [resolvable:$true] %s221
      %227 = dma.vmem_to_hbm [thread:$0]  %s222, 32, %s5, [#allocation4], 32, 32, 2
    $region29: #{tpu_custom_call.1} parent=1 // pred_fallthru
      _
    // Predicated region
    $region30: #{tpu_custom_call.1} parent=1 // pred_check
      _
    $region31: #{tpu_custom_call.1} parent=1 // pred_check_branch
      %229 = sbr.rel (0) target = $region33
    $region32: #{tpu_custom_call.1} parent=1 // pred_region
      %230 = dma.done [#allocation4], 128
    $region33: #{tpu_custom_call.1} parent=1 // pred_fallthru
      _
    %231 = vsyncpa [#allocation3], 1
    %232 = vsyncpa [#allocation4], 1

</llo_original>
